<compile_context>
chip_gen: v6e
topology: v6e:2x2x1
jax: 0.10.0
libtpu: 0.0.40
codegen_flags: <defaults>
</compile_context>

<pallas_src>
import jax
import jax.numpy as jnp
import numpy as np
from jax.experimental import pallas as pl
from jax.experimental.pallas import tpu as pltpu

IN_FEATURES = 11
HIDDEN_WIDTH = 32          # hidden_layer_width
MODEL_DEPTH = 1            # model_depth
BATCH = 8
AUG = 128                  # augmented feature width (= lane width); col AUG-1 carries the 1


def _round_up(x, m):
    return (x + m - 1) // m * m


# --------------------------------- kernel --------------------------------------------
def _ann_kernel(x_ref, w_ref, out_ref, h_ref):
    """Fused MLP forward on one batch tile.

    x_ref:   (TB, 11)       raw input rows (only the real 44 B/row cross HBM)
    w_ref:   (L, AUG, AUG)  packed affine weights (bias folded into last row;
                            non-final layers keep w[AUG-1, AUG-1] = 1 so the
                            ones column survives ReLU, since ReLU(1) == 1).
    out_ref: (TB, 1)        thin output column (only meaningful data written)
    h_ref:   (TB, AUG)      VMEM scratch: augmented activation
    """
    tb, aug = h_ref.shape
    nf = x_ref.shape[1]

    # Build the augmented activation in VMEM: zeros, a 1 in the last lane,
    # the raw features in the first nf lanes.  Rebuilt every grid step so the
    # kernel stays correct when the batch axis is sharded across TensorCores.
    lane = jax.lax.broadcasted_iota(jnp.int32, (tb, aug), 1)
    h_ref[...] = jnp.where(lane == aug - 1, jnp.float32(1.0), jnp.float32(0.0))
    h_ref[:, :nf] = x_ref[...]

    h = h_ref[...]
    n_layers = w_ref.shape[0]                     # static (D + 2), tiny unroll
    for l in range(n_layers - 1):
        h = jnp.maximum(
            jnp.dot(h, w_ref[l], preferred_element_type=jnp.float32), 0.0)
    y = jnp.dot(h, w_ref[n_layers - 1], preferred_element_type=jnp.float32)
    out_ref[...] = y[:, :1].astype(out_ref.dtype)


# --------------------------------- wrapper --------------------------------------------
def ann_forward(x, w_packed, *, block_b=1024):
    """x: (B, IN_FEATURES) f32; w_packed: (L, AUG, AUG) f32. Returns (B, 1) f32."""
    B, K = x.shape
    L, A, _ = w_packed.shape

    # Batch tile: multiple of 8 (f32 sublane); up to block_b (256-aligned by
    # default) for HBM-streaming efficiency, but capped near B/2 so the grid
    # has >= 2 steps and both v7x TensorCores are used for moderate batches.
    if B <= 8:
        tb = 8
    else:
        tb = min(block_b, _round_up(pl.cdiv(B, 2), 8))
    B_pad = _round_up(B, tb)
    x_in = x if B_pad == B else jnp.pad(x, ((0, B_pad - B), (0, 0)))

    out = pl.pallas_call(
        _ann_kernel,
        out_shape=jax.ShapeDtypeStruct((B_pad, 1), jnp.float32),
        grid_spec=pltpu.PrefetchScalarGridSpec(
            num_scalar_prefetch=0,
            grid=(B_pad // tb,),
            in_specs=[
                pl.BlockSpec((tb, K), lambda i: (i, 0)),        # raw batch-tiled inputs
                pl.BlockSpec((L, A, A), lambda i: (0, 0, 0)),   # weights resident every step
            ],
            out_specs=pl.BlockSpec((tb, 1), lambda i: (i, 0)),  # thin output column
            scratch_shapes=[pltpu.VMEM((tb, A), jnp.float32)],  # augmented activation
        ),
        compiler_params=pltpu.CompilerParams(
            dimension_semantics=("parallel",)),                 # megacore / 2-TC sharding
    )(x_in, w_packed)

    return out if B_pad == B else out[:B]


# --------------------------------- params ---------------------------------------------
def init_raw_params(key, in_features=IN_FEATURES, hidden=HIDDEN_WIDTH,
                    depth=MODEL_DEPTH):
    """Deterministic init mimicking torch.nn.Linear default (U(+/- 1/sqrt(fan_in))).
    Weights stored as [in, out] (transposed vs torch's [out, in])."""
    keys = jax.random.split(key, 2 * (depth + 2))
    ki = iter(keys)

    def linear(fan_in, fan_out):
        bound = 1.0 / np.sqrt(fan_in)
        w = jax.random.uniform(next(ki), (fan_in, fan_out), jnp.float32, -bound, bound)
        b = jax.random.uniform(next(ki), (fan_out,), jnp.float32, -bound, bound)
        return w, b

    w_in, b_in = linear(in_features, hidden)
    hid = [linear(hidden, hidden) for _ in range(depth)]
    w_out, b_out = linear(hidden, 1)
    return {"w_in": w_in, "b_in": b_in,
            "w_hid": [h[0] for h in hid], "b_hid": [h[1] for h in hid],
            "w_out": w_out, "b_out": b_out}


def pack_params(p, aug=AUG):
    """Fold biases and pad every layer into one (L, AUG, AUG) affine weight stack."""
    K, H = p["w_in"].shape
    layers = []

    w0 = jnp.zeros((aug, aug), jnp.float32)
    w0 = w0.at[:K, :H].set(p["w_in"]).at[aug - 1, :H].set(p["b_in"])
    w0 = w0.at[aug - 1, aug - 1].set(1.0)          # keep ones column alive through ReLU
    layers.append(w0)

    for w, b in zip(p["w_hid"], p["b_hid"]):
        wd = jnp.zeros((aug, aug), jnp.float32)
        wd = wd.at[:H, :H].set(w).at[aug - 1, :H].set(b)
        wd = wd.at[aug - 1, aug - 1].set(1.0)
        layers.append(wd)

    wl = jnp.zeros((aug, aug), jnp.float32)        # output layer: no activation, no ones col
    wl = wl.at[:H, 0].set(p["w_out"][:, 0]).at[aug - 1, 0].set(p["b_out"][0])
    layers.append(wl)

    return jnp.stack(layers, axis=0)               # (D + 2, AUG, AUG)


# --------------------------------- reference -------------------------------------------
def ann_reference(x, p):
    h = jnp.maximum(x @ p["w_in"] + p["b_in"][None, :], 0.0)
    for w, b in zip(p["w_hid"], p["b_hid"]):
        h = jnp.maximum(h @ w + b[None, :], 0.0)
    return h @ p["w_out"] + p["b_out"][None, :]


if __name__ == "__main__":
    key = jax.random.PRNGKey(0)
    k_param, k_x, k_x2 = jax.random.split(key, 3)

    raw = init_raw_params(k_param)
    w_packed = pack_params(raw)

    fwd = jax.jit(ann_forward)

    # Small shape consistent with the module: batch=8, 11 input features.
    x = jax.random.normal(k_x, (BATCH, IN_FEATURES), dtype=jnp.float32)
    out = jax.block_until_ready(fwd(x, w_packed))
    ref = ann_reference(x, raw)
    np.testing.assert_allclose(np.asarray(out), np.asarray(ref), rtol=1e-5, atol=1e-5)
    assert out.shape == (BATCH, 1)

    # Multi-tile / padded path: 2 grid steps, batch not a multiple of the tile.
    x2 = jax.random.normal(k_x2, (200, IN_FEATURES), dtype=jnp.float32)
    out2 = jax.block_until_ready(fwd(x2, w_packed))
    ref2 = ann_reference(x2, raw)
    np.testing.assert_allclose(np.asarray(out2), np.asarray(ref2), rtol=1e-5, atol=1e-5)
    assert out2.shape == (200, 1)

    print("KERNEL_OK")
</pallas_src>

<mosaic_0001>
module attributes {stable_mosaic.version = 11 : i64} {
  func.func @_ann_kernel(%arg0: i32, %arg1: memref<8x11xf32, #tpu.memory_space<vmem>>, %arg2: memref<3x128x128xf32, #tpu.memory_space<vmem>>, %arg3: memref<8x1xf32, #tpu.memory_space<vmem>>, %arg4: memref<8x128xf32, #tpu.memory_space<vmem>>) attributes {dimension_semantics = [#tpu.dimension_semantics<parallel>], iteration_bounds = array<i64: 1>, scalar_prefetch = 0 : i64, scratch_operands = 1 : i64, tpu.core_type = #tpu.core_type<tc>, window_params = [{transform_indices = @transform_0, window_bounds = array<i64: 8, 11>}, {pipeline_mode = #tpu.pipeline_mode<synchronous>, transform_indices = @transform_1, window_bounds = array<i64: 3, 128, 128>}, {transform_indices = @transform_2, window_bounds = array<i64: 8, 1>}]} {
    %0 = tpu.iota {dimensions = array<i32: 1>} : vector<8x128xi32>
    %c127_i32 = arith.constant 127 : i32
    %1 = vector.broadcast %c127_i32 : i32 to vector<8x128xi32>
    %2 = arith.cmpi eq, %0, %1 : vector<8x128xi32>
    %cst = arith.constant 1.000000e+00 : f32
    %cst_0 = arith.constant 0.000000e+00 : f32
    %3 = vector.broadcast %cst : f32 to vector<8x128xf32>
    %4 = vector.broadcast %cst_0 : f32 to vector<8x128xf32>
    %5 = arith.select %2, %3, %4 : vector<8x128xi1>, vector<8x128xf32>
    %c0 = arith.constant 0 : index
    %c0_1 = arith.constant 0 : index
    %6 = vector.load %arg4[%c0, %c0_1] : memref<8x128xf32, #tpu.memory_space<vmem>>, vector<8x128xf32>
    tpu.vector_store %arg4[%c0, %c0_1], %5 {strides = array<i32>} : memref<8x128xf32, #tpu.memory_space<vmem>>, vector<8x128xf32>,
    %c0_2 = arith.constant 0 : index
    %c0_3 = arith.constant 0 : index
    %7 = vector.load %arg1[%c0_2, %c0_3] : memref<8x11xf32, #tpu.memory_space<vmem>>, vector<8x11xf32>
    %c0_4 = arith.constant 0 : index
    %c0_5 = arith.constant 0 : index
    %8 = vector.load %arg4[%c0_4, %c0_5] : memref<8x128xf32, #tpu.memory_space<vmem>>, vector<8x11xf32>
    tpu.vector_store %arg4[%c0_4, %c0_5], %7 {strides = array<i32>} : memref<8x128xf32, #tpu.memory_space<vmem>>, vector<8x11xf32>,
    %c0_6 = arith.constant 0 : index
    %c0_7 = arith.constant 0 : index
    %9 = vector.load %arg4[%c0_6, %c0_7] : memref<8x128xf32, #tpu.memory_space<vmem>>, vector<8x128xf32>
    %c0_8 = arith.constant 0 : index
    %c0_9 = arith.constant 0 : index
    %c0_10 = arith.constant 0 : index
    %10 = vector.load %arg2[%c0_8, %c0_9, %c0_10] : memref<3x128x128xf32, #tpu.memory_space<vmem>>, vector<1x128x128xf32>
    %11 = vector.shape_cast %10 : vector<1x128x128xf32> to vector<128x128xf32>
    %cst_11 = arith.constant dense<0.000000e+00> : vector<8x128xf32>
    %12 = tpu.matmul %9, %11, %cst_11 {dimension_numbers = #tpu.dot_dimension_numbers<[1], [0], [0], [1], [0, 0, 1, 1], [], []>} : vector<8x128xf32>, vector<128x128xf32>, vector<8x128xf32> -> vector<8x128xf32>
    %cst_12 = arith.constant 0.000000e+00 : f32
    %13 = vector.broadcast %cst_12 : f32 to vector<8x128xf32>
    %14 = arith.maximumf %12, %13 : vector<8x128xf32>
    %c1 = arith.constant 1 : index
    %c0_13 = arith.constant 0 : index
    %c0_14 = arith.constant 0 : index
    %15 = vector.load %arg2[%c1, %c0_13, %c0_14] : memref<3x128x128xf32, #tpu.memory_space<vmem>>, vector<1x128x128xf32>
    %16 = vector.shape_cast %15 : vector<1x128x128xf32> to vector<128x128xf32>
    %cst_15 = arith.constant dense<0.000000e+00> : vector<8x128xf32>
    %17 = tpu.matmul %14, %16, %cst_15 {dimension_numbers = #tpu.dot_dimension_numbers<[1], [0], [0], [1], [0, 0, 1, 1], [], []>} : vector<8x128xf32>, vector<128x128xf32>, vector<8x128xf32> -> vector<8x128xf32>
    %cst_16 = arith.constant 0.000000e+00 : f32
    %18 = vector.broadcast %cst_16 : f32 to vector<8x128xf32>
    %19 = arith.maximumf %17, %18 : vector<8x128xf32>
    %c2 = arith.constant 2 : index
    %c0_17 = arith.constant 0 : index
    %c0_18 = arith.constant 0 : index
    %20 = vector.load %arg2[%c2, %c0_17, %c0_18] : memref<3x128x128xf32, #tpu.memory_space<vmem>>, vector<1x128x128xf32>
    %21 = vector.shape_cast %20 : vector<1x128x128xf32> to vector<128x128xf32>
    %cst_19 = arith.constant dense<0.000000e+00> : vector<8x128xf32>
    %22 = tpu.matmul %19, %21, %cst_19 {dimension_numbers = #tpu.dot_dimension_numbers<[1], [0], [0], [1], [0, 0, 1, 1], [], []>} : vector<8x128xf32>, vector<128x128xf32>, vector<8x128xf32> -> vector<8x128xf32>
    %23 = vector.extract_strided_slice %22 {offsets = [0, 0], sizes = [8, 1], strides = [1, 1]} : vector<8x128xf32> to vector<8x1xf32>
    %c0_20 = arith.constant 0 : index
    %c0_21 = arith.constant 0 : index
    %24 = vector.load %arg3[%c0_20, %c0_21] : memref<8x1xf32, #tpu.memory_space<vmem>>, vector<8x1xf32>
    tpu.vector_store %arg3[%c0_20, %c0_21], %23 {strides = array<i32>} : memref<8x1xf32, #tpu.memory_space<vmem>>, vector<8x1xf32>,
    return
  }
  func.func @transform_0(%arg0: i32) -> (i32, i32) {
    %c0_i32 = arith.constant 0 : i32
    %c0_i32_0 = arith.constant 0 : i32
    return %arg0, %c0_i32 : i32, i32
  }
  func.func @transform_1(%arg0: i32) -> (i32, i32, i32) {
    %c0_i32 = arith.constant 0 : i32
    %c0_i32_0 = arith.constant 0 : i32
    %c0_i32_1 = arith.constant 0 : i32
    %c0_i32_2 = arith.constant 0 : i32
    return %c0_i32, %c0_i32_0, %c0_i32_1 : i32, i32, i32
  }
  func.func @transform_2(%arg0: i32) -> (i32, i32) {
    %c0_i32 = arith.constant 0 : i32
    %c0_i32_0 = arith.constant 0 : i32
    return %arg0, %c0_i32 : i32, i32
  }
}

</mosaic_0001>

<llo_original>
// kernel: ann_forward.1
$region0: #{ann_forward.1}
  #allocation0 [shape = 'u32[]', space=smem, size = 0x4, offset = 0x4, fixed_abs, tag = 'smem constant byte address 0x4 - core index']
  #allocation1 [shape = 'u32[144,128]{1,0:T(1,128)}', space=vmem, size = 0x12000, scoped, tag = 'internal scratch']
  #allocation2 [shape = 'f32[8,128]{1,0:T(8,128)}', space=vmem, size = 0x1000, scoped, tag = 'scratch operand']
  %s0 = inlined_call_operand.hbm [shape: f32[8,11], index: 0, kind: input, shape index: {}]
  %s1 = inlined_call_operand.hbm [shape: f32[3,128,128], index: 1, kind: input, shape index: {}]
  %s2 = inlined_call_operand.vmem [shape: f32[8,1], index: 2, kind: output, shape index: {}]
  %s3 = sld [smem:[#allocation0]]
  $region26: #{ann_forward.1} parent=0
    _
  %s5 = ssub.s32 1, %s3
  %s6 = scalar_select 0, %s5, %s3
  $region1: #{ann_forward.1} parent=0
    #allocation3 [shape = 'u8[4096]{0}', space=vmem, size = 0x1000, scoped, tag = 'input window, operand 0, single buffered']
    #allocation4 [shape = 's32[1]{0}', space=sflag, size = 0x4, scoped, tag = 'scoped memory for ann_forward.1']
    #allocation5 [shape = 'u8[196608]{0}', space=vmem, size = 0x30000, scoped, tag = 'input window, operand 1, single buffered']
    #allocation6 [shape = 's32[1]{0}', space=sflag, size = 0x4, scoped, tag = 'scoped memory for ann_forward.1']
    %7 = vsyncpa [#allocation4], 0
    %8 = vsyncpa [#allocation6], 0
    // Predicated region
    $region2: #{ann_forward.1} parent=1 // pred_check
      _
    $region3: #{ann_forward.1} parent=1 // pred_check_branch
      %10 = sbr.rel (0) target = $region5
    $region4: #{ann_forward.1} parent=1 // pred_region
      %s12 = ssub.s32 128, 128
      %13 = vsyncadd [#allocation4], %s12
      %s15 = sshll.u32 [#allocation3], 4
      %s16 = int_to_ptr.vmem [resolvable:$true] %s15
      %18 = dma.hbm_to_vmem [thread:$0]  %s0, 128, %s16, [#allocation4]
    $region5: #{ann_forward.1} parent=1 // pred_fallthru
      _
    // Predicated region
    $region6: #{ann_forward.1} parent=1 // pred_check
      _
    $region7: #{ann_forward.1} parent=1 // pred_check_branch
      %20 = sbr.rel (0) target = $region9
    $region8: #{ann_forward.1} parent=1 // pred_region
      %s22 = ssub.s32 6144, 6144
      %23 = vsyncadd [#allocation6], %s22
      %s24 = sshll.u32 [#allocation5], 4
      %s25 = int_to_ptr.vmem [resolvable:$true] %s24
      %30 = dma.hbm_to_vmem [thread:$0]  %s1, 6144, %s25, [#allocation6], 128, 128, 8
    $region9: #{ann_forward.1} parent=1 // pred_fallthru
      _
    // Predicated region
    $region10: #{ann_forward.1} parent=1 // pred_check
      _
    $region11: #{ann_forward.1} parent=1 // pred_check_branch
      %32 = sbr.rel (0) target = $region13
    $region12: #{ann_forward.1} parent=1 // pred_region
      %33 = dma.done [#allocation4], 128
    $region13: #{ann_forward.1} parent=1 // pred_fallthru
      _
    // Predicated region
    $region14: #{ann_forward.1} parent=1 // pred_check
      _
    $region15: #{ann_forward.1} parent=1 // pred_check_branch
      %35 = sbr.rel (0) target = $region17
    $region16: #{ann_forward.1} parent=1 // pred_region
      %36 = dma.done [#allocation6], 6144
    $region17: #{ann_forward.1} parent=1 // pred_fallthru
      _
    %v37 = vlaneseq
    %v38 = vand.u32 %v37, 127
    %vm39 = vcmp.eq.s32.totalorder %v38, 127
    %v40 = vsel %vm39, 1.0, 0.0
    %41 = vst [vmem:[#allocation2] sm:$0xff] %v40
    %v42 = vld [vmem:[#allocation3] sm:$0xff]
    %vm43 = vcmask 89088
    %44 = vst.msk [vmem:[#allocation2] sm:$0xff] %vm43, %v42
    %v45 = vld [vmem:[#allocation2] sm:$0xff]
    %v46 = vld [vmem:[#allocation5] sm:$0xff]
    %v47 = vld [vmem:[#allocation5 + $0x8] sm:$0xff]
    %v48 = vld [vmem:[#allocation5 + $0x10] sm:$0xff]
    %v49 = vld [vmem:[#allocation5 + $0x18] sm:$0xff]
    %v50 = vld [vmem:[#allocation5 + $0x20] sm:$0xff]
    %v51 = vld [vmem:[#allocation5 + $0x28] sm:$0xff]
    %v52 = vld [vmem:[#allocation5 + $0x30] sm:$0xff]
    %v53 = vld [vmem:[#allocation5 + $0x38] sm:$0xff]
    %v54 = vld [vmem:[#allocation5 + $0x40] sm:$0xff]
    %v55 = vld [vmem:[#allocation5 + $0x48] sm:$0xff]
    %v56 = vld [vmem:[#allocation5 + $0x50] sm:$0xff]
    %v57 = vld [vmem:[#allocation5 + $0x58] sm:$0xff]
    %v58 = vld [vmem:[#allocation5 + $0x60] sm:$0xff]
    %v59 = vld [vmem:[#allocation5 + $0x68] sm:$0xff]
    %v60 = vld [vmem:[#allocation5 + $0x70] sm:$0xff]
    %v61 = vld [vmem:[#allocation5 + $0x78] sm:$0xff]
    %62 = vmatprep.subr.mxu0 0.0
    %63 = vmatpush1.msra.mxu0 %v61
    %64 = vmatprep.subr.mxu0 0.0
    %65 = vmatpush1.msra.mxu0 %v60
    %66 = vmatprep.subr.mxu0 0.0
    %67 = vmatpush1.msra.mxu0 %v59
    %68 = vmatprep.subr.mxu0 0.0
    %69 = vmatpush1.msra.mxu0 %v58
    %70 = vmatprep.subr.mxu0 0.0
    %71 = vmatpush1.msra.mxu0 %v57
    %72 = vmatprep.subr.mxu0 0.0
    %73 = vmatpush1.msra.mxu0 %v56
    %74 = vmatprep.subr.mxu0 0.0
    %75 = vmatpush1.msra.mxu0 %v55
    %76 = vmatprep.subr.mxu0 0.0
    %77 = vmatpush1.msra.mxu0 %v54
    %78 = vmatprep.subr.mxu0 0.0
    %79 = vmatpush1.msra.mxu0 %v53
    %80 = vmatprep.subr.mxu0 0.0
    %81 = vmatpush1.msra.mxu0 %v52
    %82 = vmatprep.subr.mxu0 0.0
    %83 = vmatpush1.msra.mxu0 %v51
    %84 = vmatprep.subr.mxu0 0.0
    %85 = vmatpush1.msra.mxu0 %v50
    %86 = vmatprep.subr.mxu0 0.0
    %87 = vmatpush1.msra.mxu0 %v49
    %88 = vmatprep.subr.mxu0 0.0
    %89 = vmatpush1.msra.mxu0 %v48
    %90 = vmatprep.subr.mxu0 0.0
    %91 = vmatpush1.msra.mxu0 %v47
    %92 = vmatprep.subr.mxu0 0.0
    %93 = vmatpush1.msra.mxu0 %v46
    %94 = vmatprep.subr.mxu0 0.0
    %95 = vmatpush2.msra.mxu0 0.0
    %96 = vmatprep.subr.mxu0 0.0
    %97 = vmatpush2.msra.mxu0 0.0
    %98 = vmatprep.subr.mxu0 0.0
    %99 = vmatpush2.msra.mxu0 0.0
    %100 = vmatprep.subr.mxu0 0.0
    %101 = vmatpush2.msra.mxu0 0.0
    %102 = vmatprep.subr.mxu0 0.0
    %103 = vmatpush2.msra.mxu0 0.0
    %104 = vmatprep.subr.mxu0 0.0
    %105 = vmatpush2.msra.mxu0 0.0
    %106 = vmatprep.subr.mxu0 0.0
    %107 = vmatpush2.msra.mxu0 0.0
    %108 = vmatprep.subr.mxu0 0.0
    %109 = vmatpush2.msra.mxu0 0.0
    %110 = vmatprep.subr.mxu0 0.0
    %111 = vmatpush2.msra.mxu0 0.0
    %112 = vmatprep.subr.mxu0 0.0
    %113 = vmatpush2.msra.mxu0 0.0
    %114 = vmatprep.subr.mxu0 0.0
    %115 = vmatpush2.msra.mxu0 0.0
    %116 = vmatprep.subr.mxu0 0.0
    %117 = vmatpush2.msra.mxu0 0.0
    %118 = vmatprep.subr.mxu0 0.0
    %119 = vmatpush2.msra.mxu0 0.0
    %120 = vmatprep.subr.mxu0 0.0
    %121 = vmatpush2.msra.mxu0 0.0
    %122 = vmatprep.subr.mxu0 0.0
    %123 = vmatpush2.msra.mxu0 0.0
    %124 = vmatprep.subr.mxu0 0.0
    %125 = vmatpush2.msra.mxu0 0.0
    %126 = vmatprep.mubr.f32.mxu0 0.0
    %127 = vmatmul.mubr.f32.gmra.mxu0 %v45
    %v128 = vpop.f32.mrf.mxu0
    %v129 = vadd.f32 0.0, %v128
    %v130 = vpop.f32.mrf.mxu0
    %131 = vdwg.mxu0
    %v132 = vmax.f32 %v129, 0.0
    %s133 = scalar_lea.vmem [#allocation5], 128
    %v134 = vld [vmem:[%s133] sm:$0xff]
    %v135 = vld [vmem:[%s133 + $0x8] sm:$0xff]
    %v136 = vld [vmem:[%s133 + $0x10] sm:$0xff]
    %v137 = vld [vmem:[%s133 + $0x18] sm:$0xff]
    %v138 = vld [vmem:[%s133 + $0x20] sm:$0xff]
    %v139 = vld [vmem:[%s133 + $0x28] sm:$0xff]
    %v140 = vld [vmem:[%s133 + $0x30] sm:$0xff]
    %v141 = vld [vmem:[%s133 + $0x38] sm:$0xff]
    %v142 = vld [vmem:[%s133 + $0x40] sm:$0xff]
    %v143 = vld [vmem:[%s133 + $0x48] sm:$0xff]
    %v144 = vld [vmem:[%s133 + $0x50] sm:$0xff]
    %v145 = vld [vmem:[%s133 + $0x58] sm:$0xff]
    %v146 = vld [vmem:[%s133 + $0x60] sm:$0xff]
    %v147 = vld [vmem:[%s133 + $0x68] sm:$0xff]
    %v148 = vld [vmem:[%s133 + $0x70] sm:$0xff]
    %v149 = vld [vmem:[%s133 + $0x78] sm:$0xff]
    %150 = vmatprep.subr.mxu0 0.0
    %151 = vmatpush1.msra.mxu0 %v149
    %152 = vmatprep.subr.mxu0 0.0
    %153 = vmatpush1.msra.mxu0 %v148
    %154 = vmatprep.subr.mxu0 0.0
    %155 = vmatpush1.msra.mxu0 %v147
    %156 = vmatprep.subr.mxu0 0.0
    %157 = vmatpush1.msra.mxu0 %v146
    %158 = vmatprep.subr.mxu0 0.0
    %159 = vmatpush1.msra.mxu0 %v145
    %160 = vmatprep.subr.mxu0 0.0
    %161 = vmatpush1.msra.mxu0 %v144
    %162 = vmatprep.subr.mxu0 0.0
    %163 = vmatpush1.msra.mxu0 %v143
    %164 = vmatprep.subr.mxu0 0.0
    %165 = vmatpush1.msra.mxu0 %v142
    %166 = vmatprep.subr.mxu0 0.0
    %167 = vmatpush1.msra.mxu0 %v141
    %168 = vmatprep.subr.mxu0 0.0
    %169 = vmatpush1.msra.mxu0 %v140
    %170 = vmatprep.subr.mxu0 0.0
    %171 = vmatpush1.msra.mxu0 %v139
    %172 = vmatprep.subr.mxu0 0.0
    %173 = vmatpush1.msra.mxu0 %v138
    %174 = vmatprep.subr.mxu0 0.0
    %175 = vmatpush1.msra.mxu0 %v137
    %176 = vmatprep.subr.mxu0 0.0
    %177 = vmatpush1.msra.mxu0 %v136
    %178 = vmatprep.subr.mxu0 0.0
    %179 = vmatpush1.msra.mxu0 %v135
    %180 = vmatprep.subr.mxu0 0.0
    %181 = vmatpush1.msra.mxu0 %v134
    %182 = vmatprep.subr.mxu0 0.0
    %183 = vmatpush2.msra.mxu0 0.0
    %184 = vmatprep.subr.mxu0 0.0
    %185 = vmatpush2.msra.mxu0 0.0
    %186 = vmatprep.subr.mxu0 0.0
    %187 = vmatpush2.msra.mxu0 0.0
    %188 = vmatprep.subr.mxu0 0.0
    %189 = vmatpush2.msra.mxu0 0.0
    %190 = vmatprep.subr.mxu0 0.0
    %191 = vmatpush2.msra.mxu0 0.0
    %192 = vmatprep.subr.mxu0 0.0
    %193 = vmatpush2.msra.mxu0 0.0
    %194 = vmatprep.subr.mxu0 0.0
    %195 = vmatpush2.msra.mxu0 0.0
    %196 = vmatprep.subr.mxu0 0.0
    %197 = vmatpush2.msra.mxu0 0.0
    %198 = vmatprep.subr.mxu0 0.0
    %199 = vmatpush2.msra.mxu0 0.0
    %200 = vmatprep.subr.mxu0 0.0
    %201 = vmatpush2.msra.mxu0 0.0
    %202 = vmatprep.subr.mxu0 0.0
    %203 = vmatpush2.msra.mxu0 0.0
    %204 = vmatprep.subr.mxu0 0.0
    %205 = vmatpush2.msra.mxu0 0.0
    %206 = vmatprep.subr.mxu0 0.0
    %207 = vmatpush2.msra.mxu0 0.0
    %208 = vmatprep.subr.mxu0 0.0
    %209 = vmatpush2.msra.mxu0 0.0
    %210 = vmatprep.subr.mxu0 0.0
    %211 = vmatpush2.msra.mxu0 0.0
    %212 = vmatprep.subr.mxu0 0.0
    %213 = vmatpush2.msra.mxu0 0.0
    %214 = vmatprep.mubr.f32.mxu0 0.0
    %215 = vmatmul.mubr.f32.gmra.mxu0 %v132
    %v216 = vpop.f32.mrf.mxu0
    %v217 = vadd.f32 0.0, %v216
    %v218 = vpop.f32.mrf.mxu0
    %219 = vdwg.mxu0
    %v220 = vmax.f32 %v217, 0.0
    %s221 = scalar_lea.vmem [#allocation5], 256
    %v222 = vld [vmem:[%s221] sm:$0xff]
    %v223 = vld [vmem:[%s221 + $0x8] sm:$0xff]
    %v224 = vld [vmem:[%s221 + $0x10] sm:$0xff]
    %v225 = vld [vmem:[%s221 + $0x18] sm:$0xff]
    %v226 = vld [vmem:[%s221 + $0x20] sm:$0xff]
    %v227 = vld [vmem:[%s221 + $0x28] sm:$0xff]
    %v228 = vld [vmem:[%s221 + $0x30] sm:$0xff]
    %v229 = vld [vmem:[%s221 + $0x38] sm:$0xff]
    %v230 = vld [vmem:[%s221 + $0x40] sm:$0xff]
    %v231 = vld [vmem:[%s221 + $0x48] sm:$0xff]
    %v232 = vld [vmem:[%s221 + $0x50] sm:$0xff]
    %v233 = vld [vmem:[%s221 + $0x58] sm:$0xff]
    %v234 = vld [vmem:[%s221 + $0x60] sm:$0xff]
    %v235 = vld [vmem:[%s221 + $0x68] sm:$0xff]
    %v236 = vld [vmem:[%s221 + $0x70] sm:$0xff]
    %v237 = vld [vmem:[%s221 + $0x78] sm:$0xff]
    %238 = vmatprep.subr.mxu0 0.0
    %239 = vmatpush1.msra.mxu0 %v237
    %240 = vmatprep.subr.mxu0 0.0
    %241 = vmatpush1.msra.mxu0 %v236
    %242 = vmatprep.subr.mxu0 0.0
    %243 = vmatpush1.msra.mxu0 %v235
    %244 = vmatprep.subr.mxu0 0.0
    %245 = vmatpush1.msra.mxu0 %v234
    %246 = vmatprep.subr.mxu0 0.0
    %247 = vmatpush1.msra.mxu0 %v233
    %248 = vmatprep.subr.mxu0 0.0
    %249 = vmatpush1.msra.mxu0 %v232
    %250 = vmatprep.subr.mxu0 0.0
    %251 = vmatpush1.msra.mxu0 %v231
    %252 = vmatprep.subr.mxu0 0.0
    %253 = vmatpush1.msra.mxu0 %v230
    %254 = vmatprep.subr.mxu0 0.0
    %255 = vmatpush1.msra.mxu0 %v229
    %256 = vmatprep.subr.mxu0 0.0
    %257 = vmatpush1.msra.mxu0 %v228
    %258 = vmatprep.subr.mxu0 0.0
    %259 = vmatpush1.msra.mxu0 %v227
    %260 = vmatprep.subr.mxu0 0.0
    %261 = vmatpush1.msra.mxu0 %v226
    %262 = vmatprep.subr.mxu0 0.0
    %263 = vmatpush1.msra.mxu0 %v225
    %264 = vmatprep.subr.mxu0 0.0
    %265 = vmatpush1.msra.mxu0 %v224
    %266 = vmatprep.subr.mxu0 0.0
    %267 = vmatpush1.msra.mxu0 %v223
    %268 = vmatprep.subr.mxu0 0.0
    %269 = vmatpush1.msra.mxu0 %v222
    %270 = vmatprep.subr.mxu0 0.0
    %271 = vmatpush2.msra.mxu0 0.0
    %272 = vmatprep.subr.mxu0 0.0
    %273 = vmatpush2.msra.mxu0 0.0
    %274 = vmatprep.subr.mxu0 0.0
    %275 = vmatpush2.msra.mxu0 0.0
    %276 = vmatprep.subr.mxu0 0.0
    %277 = vmatpush2.msra.mxu0 0.0
    %278 = vmatprep.subr.mxu0 0.0
    %279 = vmatpush2.msra.mxu0 0.0
    %280 = vmatprep.subr.mxu0 0.0
    %281 = vmatpush2.msra.mxu0 0.0
    %282 = vmatprep.subr.mxu0 0.0
    %283 = vmatpush2.msra.mxu0 0.0
    %284 = vmatprep.subr.mxu0 0.0
    %285 = vmatpush2.msra.mxu0 0.0
    %286 = vmatprep.subr.mxu0 0.0
    %287 = vmatpush2.msra.mxu0 0.0
    %288 = vmatprep.subr.mxu0 0.0
    %289 = vmatpush2.msra.mxu0 0.0
    %290 = vmatprep.subr.mxu0 0.0
    %291 = vmatpush2.msra.mxu0 0.0
    %292 = vmatprep.subr.mxu0 0.0
    %293 = vmatpush2.msra.mxu0 0.0
    %294 = vmatprep.subr.mxu0 0.0
    %295 = vmatpush2.msra.mxu0 0.0
    %296 = vmatprep.subr.mxu0 0.0
    %297 = vmatpush2.msra.mxu0 0.0
    %298 = vmatprep.subr.mxu0 0.0
    %299 = vmatpush2.msra.mxu0 0.0
    %300 = vmatprep.subr.mxu0 0.0
    %301 = vmatpush2.msra.mxu0 0.0
    %302 = vmatprep.mubr.f32.mxu0 0.0
    %303 = vmatmul.mubr.f32.gmra.mxu0 %v220
    %v304 = vpop.f32.mrf.mxu0
    %v305 = vadd.f32 0.0, %v304
    %v306 = vpop.f32.mrf.mxu0
    %307 = vdwg.mxu0
    %vm308 = vcmask 7168
    %309 = vst.msk [vmem:[%s2] sm:$0xff] %vm308, %v305
    // Predicated region
    $region18: #{ann_forward.1} parent=1 // pred_check
      _
    $region19: #{ann_forward.1} parent=1 // pred_check_branch
      %311 = sbr.rel (0) target = $region21
    $region20: #{ann_forward.1} parent=1 // pred_region
      _
    $region21: #{ann_forward.1} parent=1 // pred_fallthru
      _
    // Predicated region
    $region22: #{ann_forward.1} parent=1 // pred_check
      _
    $region23: #{ann_forward.1} parent=1 // pred_check_branch
      %313 = sbr.rel (0) target = $region25
    $region24: #{ann_forward.1} parent=1 // pred_region
      _
    $region25: #{ann_forward.1} parent=1 // pred_fallthru
      _
    %314 = vsyncpa [#allocation4], 1
    %315 = vsyncpa [#allocation6], 1

</llo_original>
